<compile_context>
chip_gen: v5e
topology: v5e:2x2
jax: 0.10.0
libtpu: 0.0.40
codegen_flags: <defaults>
</compile_context>

<pallas_src>
import functools

import jax
import jax.numpy as jnp
from jax.experimental import pallas as pl
from jax.experimental.pallas import tpu as pltpu

_LANE = 128      # lane width (last dim)
_SUBLANE = 8     # f32 sublane count (second-to-last dim)


def _round_up(x, m):
    return (x + m - 1) // m * m


def _sae_kernel(x_ref, w1_ref, b1_ref, w2_ref, b2_ref, enc_ref, dec_ref, *, compute_dtype):
    # Encoder: Linear(input_dim -> hidden_dim) + ReLU   (MXU matmul, f32 accumulation)
    x = x_ref[...].astype(compute_dtype)
    w1 = w1_ref[...].astype(compute_dtype)
    h = jnp.dot(x, w1, preferred_element_type=jnp.float32) + b1_ref[...]
    encoded = jnp.maximum(h, 0.0)                      # f32 activations
    enc_ref[...] = encoded.astype(enc_ref.dtype)

    # Decoder: Linear(hidden_dim -> input_dim) + Sigmoid
    w2 = w2_ref[...].astype(compute_dtype)
    d = jnp.dot(encoded.astype(compute_dtype), w2, preferred_element_type=jnp.float32)
    d = d + b2_ref[...]
    dec_ref[...] = jax.nn.sigmoid(d).astype(dec_ref.dtype)


@functools.partial(jax.jit, static_argnames=("block_b", "compute_dtype"))
def sparse_autoencoder(x, w1, b1, w2, b2, *, block_b=128, compute_dtype=jnp.float32):
    """x: [B, input_dim]; w1: [input_dim, hidden_dim]; b1: [hidden_dim] or [1, hidden_dim];
    w2: [hidden_dim, input_dim]; b2: [input_dim] or [1, input_dim].
    Returns (encoded [B, hidden_dim], decoded [B, input_dim])."""
    B, input_dim = x.shape
    hidden_dim = w1.shape[1]
    b1 = b1.reshape(1, -1)
    b2 = b2.reshape(1, -1)

    # Lane-pad feature dims to 128, sublane-align/tile the batch dim.
    din_p = _round_up(input_dim, _LANE)
    hid_p = _round_up(hidden_dim, _LANE)
    tb = _round_up(min(block_b, _round_up(B, _SUBLANE)), _SUBLANE)
    b_p = _round_up(B, tb)

    xp = jnp.zeros((b_p, din_p), x.dtype).at[:B, :input_dim].set(x)
    w1p = jnp.zeros((din_p, hid_p), w1.dtype).at[:input_dim, :hidden_dim].set(w1)
    b1p = jnp.zeros((1, hid_p), b1.dtype).at[:, :hidden_dim].set(b1)
    w2p = jnp.zeros((hid_p, din_p), w2.dtype).at[:hidden_dim, :input_dim].set(w2)
    b2p = jnp.zeros((1, din_p), b2.dtype).at[:, :input_dim].set(b2)

    grid = (b_p // tb,)

    # VMEM budget: double-buffered x/enc/dec tiles + resident (double-buffered) weights.
    itemsize = 4  # blocks live in VMEM as f32-sized tiles at these dtypes
    per_step = tb * din_p + tb * hid_p + tb * din_p
    resident = din_p * hid_p + hid_p * din_p + hid_p + din_p
    vmem_bytes = (2 * per_step + 2 * resident) * itemsize
    vmem_limit = int(min(max(2 * vmem_bytes, 8 << 20), 64 << 20))

    cost = pl.CostEstimate(
        flops=4 * B * input_dim * hidden_dim,            # 2 matmuls, 2*M*N*K each
        transcendentals=B * input_dim,                   # sigmoid
        bytes_accessed=itemsize * (B * input_dim * 2     # x + decoded
                                   + B * hidden_dim      # encoded
                                   + 2 * input_dim * hidden_dim
                                   + input_dim + hidden_dim),
    )

    kernel = functools.partial(_sae_kernel, compute_dtype=compute_dtype)

    encoded_p, decoded_p = pl.pallas_call(
        kernel,
        grid=grid,
        in_specs=[
            pl.BlockSpec((tb, din_p), lambda i: (i, 0)),      # x: tiled over batch
            pl.BlockSpec((din_p, hid_p), lambda i: (0, 0)),   # w1: resident
            pl.BlockSpec((1, hid_p), lambda i: (0, 0)),       # b1: resident
            pl.BlockSpec((hid_p, din_p), lambda i: (0, 0)),   # w2: resident
            pl.BlockSpec((1, din_p), lambda i: (0, 0)),       # b2: resident
        ],
        out_specs=(
            pl.BlockSpec((tb, hid_p), lambda i: (i, 0)),
            pl.BlockSpec((tb, din_p), lambda i: (i, 0)),
        ),
        out_shape=(
            jax.ShapeDtypeStruct((b_p, hid_p), x.dtype),
            jax.ShapeDtypeStruct((b_p, din_p), x.dtype),
        ),
        compiler_params=pltpu.CompilerParams(
            dimension_semantics=("parallel",),   # shards batch tiles across TCs on v7x
            vmem_limit_bytes=vmem_limit,
        ),
        cost_estimate=cost,
    )(xp, w1p, b1p, w2p, b2p)

    # Strip batch / lane padding.
    return encoded_p[:B, :hidden_dim], decoded_p[:B, :input_dim]


def init_params(key, input_dim, hidden_dim, dtype=jnp.float32):
    """Deterministic PyTorch-style init: U(-1/sqrt(fan_in), 1/sqrt(fan_in))."""
    k1, k2, k3, k4 = jax.random.split(key, 4)
    bound1 = 1.0 / (input_dim ** 0.5)
    bound2 = 1.0 / (hidden_dim ** 0.5)
    w1 = jax.random.uniform(k1, (input_dim, hidden_dim), dtype, -bound1, bound1)
    b1 = jax.random.uniform(k2, (1, hidden_dim), dtype, -bound1, bound1)
    w2 = jax.random.uniform(k3, (hidden_dim, input_dim), dtype, -bound2, bound2)
    b2 = jax.random.uniform(k4, (1, input_dim), dtype, -bound2, bound2)
    return w1, b1, w2, b2


if __name__ == "__main__":
    input_dim, hidden_dim, batch = 50, 20, 8

    key = jax.random.PRNGKey(0)
    k_x, k_p = jax.random.split(key)
    x = jax.random.normal(k_x, (batch, input_dim), jnp.float32)
    w1, b1, w2, b2 = init_params(k_p, input_dim, hidden_dim)

    # f32 path (matches PyTorch default precision).
    encoded, decoded = sparse_autoencoder(x, w1, b1, w2, b2)
    jax.block_until_ready((encoded, decoded))

    enc_ref = jnp.maximum(x @ w1 + b1, 0.0)
    dec_ref = jax.nn.sigmoid(enc_ref @ w2 + b2)
    assert encoded.shape == (batch, hidden_dim)
    assert decoded.shape == (batch, input_dim)
    assert jnp.allclose(encoded, enc_ref, atol=1e-5), "encoded mismatch (f32)"
    assert jnp.allclose(decoded, dec_ref, atol=1e-5), "decoded mismatch (f32)"

    # bf16-operand path (v6e/v7x MXU-friendly), f32 accumulation — looser tolerance.
    enc_bf, dec_bf = sparse_autoencoder(x, w1, b1, w2, b2, compute_dtype=jnp.bfloat16)
    jax.block_until_ready((enc_bf, dec_bf))
    assert jnp.allclose(enc_bf, enc_ref, atol=5e-2), "encoded mismatch (bf16)"
    assert jnp.allclose(dec_bf, dec_ref, atol=5e-2), "decoded mismatch (bf16)"

    print("KERNEL_OK")
</pallas_src>

<mosaic_0001>
module attributes {stable_mosaic.version = 11 : i64} {
  func.func @_sae_kernel(%arg0: i32, %arg1: memref<8x128xf32, #tpu.memory_space<vmem>>, %arg2: memref<128x128xf32, #tpu.memory_space<vmem>>, %arg3: memref<1x128xf32, #tpu.memory_space<vmem>>, %arg4: memref<128x128xf32, #tpu.memory_space<vmem>>, %arg5: memref<1x128xf32, #tpu.memory_space<vmem>>, %arg6: memref<8x128xf32, #tpu.memory_space<vmem>>, %arg7: memref<8x128xf32, #tpu.memory_space<vmem>>) attributes {dimension_semantics = [#tpu.dimension_semantics<parallel>], iteration_bounds = array<i64: 1>, scalar_prefetch = 0 : i64, scratch_operands = 0 : i64, tpu.core_type = #tpu.core_type<tc>, window_params = [{transform_indices = @transform_0, window_bounds = array<i64: 8, 128>}, {pipeline_mode = #tpu.pipeline_mode<synchronous>, transform_indices = @transform_1, window_bounds = array<i64: 128, 128>}, {pipeline_mode = #tpu.pipeline_mode<synchronous>, transform_indices = @transform_2, window_bounds = array<i64: 1, 128>}, {pipeline_mode = #tpu.pipeline_mode<synchronous>, transform_indices = @transform_3, window_bounds = array<i64: 128, 128>}, {pipeline_mode = #tpu.pipeline_mode<synchronous>, transform_indices = @transform_4, window_bounds = array<i64: 1, 128>}, {transform_indices = @transform_5, window_bounds = array<i64: 8, 128>}, {transform_indices = @transform_6, window_bounds = array<i64: 8, 128>}]} {
    %c0 = arith.constant 0 : index
    %c0_0 = arith.constant 0 : index
    %0 = vector.load %arg1[%c0, %c0_0] : memref<8x128xf32, #tpu.memory_space<vmem>>, vector<8x128xf32>
    %c0_1 = arith.constant 0 : index
    %c0_2 = arith.constant 0 : index
    %1 = vector.load %arg2[%c0_1, %c0_2] : memref<128x128xf32, #tpu.memory_space<vmem>>, vector<128x128xf32>
    %cst = arith.constant dense<0.000000e+00> : vector<8x128xf32>
    %2 = tpu.matmul %0, %1, %cst {dimension_numbers = #tpu.dot_dimension_numbers<[1], [0], [0], [1], [0, 0, 1, 1], [], []>} : vector<8x128xf32>, vector<128x128xf32>, vector<8x128xf32> -> vector<8x128xf32>
    %c0_3 = arith.constant 0 : index
    %c0_4 = arith.constant 0 : index
    %3 = vector.load %arg3[%c0_3, %c0_4] : memref<1x128xf32, #tpu.memory_space<vmem>>, vector<1x128xf32>
    %4 = vector.broadcast %3 : vector<1x128xf32> to vector<8x128xf32>
    %5 = arith.addf %2, %4 : vector<8x128xf32>
    %cst_5 = arith.constant 0.000000e+00 : f32
    %6 = vector.broadcast %cst_5 : f32 to vector<8x128xf32>
    %7 = arith.maximumf %5, %6 : vector<8x128xf32>
    %c0_6 = arith.constant 0 : index
    %c0_7 = arith.constant 0 : index
    %8 = vector.load %arg6[%c0_6, %c0_7] : memref<8x128xf32, #tpu.memory_space<vmem>>, vector<8x128xf32>
    tpu.vector_store %arg6[%c0_6, %c0_7], %7 {strides = array<i32>} : memref<8x128xf32, #tpu.memory_space<vmem>>, vector<8x128xf32>,
    %c0_8 = arith.constant 0 : index
    %c0_9 = arith.constant 0 : index
    %9 = vector.load %arg4[%c0_8, %c0_9] : memref<128x128xf32, #tpu.memory_space<vmem>>, vector<128x128xf32>
    %cst_10 = arith.constant dense<0.000000e+00> : vector<8x128xf32>
    %10 = tpu.matmul %7, %9, %cst_10 {dimension_numbers = #tpu.dot_dimension_numbers<[1], [0], [0], [1], [0, 0, 1, 1], [], []>} : vector<8x128xf32>, vector<128x128xf32>, vector<8x128xf32> -> vector<8x128xf32>
    %c0_11 = arith.constant 0 : index
    %c0_12 = arith.constant 0 : index
    %11 = vector.load %arg5[%c0_11, %c0_12] : memref<1x128xf32, #tpu.memory_space<vmem>>, vector<1x128xf32>
    %12 = vector.broadcast %11 : vector<1x128xf32> to vector<8x128xf32>
    %13 = arith.addf %10, %12 : vector<8x128xf32>
    %14 = arith.negf %13 : vector<8x128xf32>
    %15 = math.exp %14 : vector<8x128xf32>
    %cst_13 = arith.constant 1.000000e+00 : f32
    %16 = vector.broadcast %cst_13 : f32 to vector<8x128xf32>
    %17 = arith.addf %16, %15 : vector<8x128xf32>
    %18 = arith.divf %16, %17 : vector<8x128xf32>
    %c0_14 = arith.constant 0 : index
    %c0_15 = arith.constant 0 : index
    %19 = vector.load %arg7[%c0_14, %c0_15] : memref<8x128xf32, #tpu.memory_space<vmem>>, vector<8x128xf32>
    tpu.vector_store %arg7[%c0_14, %c0_15], %18 {strides = array<i32>} : memref<8x128xf32, #tpu.memory_space<vmem>>, vector<8x128xf32>,
    return
  }
  func.func @transform_0(%arg0: i32) -> (i32, i32) {
    %c0_i32 = arith.constant 0 : i32
    %c0_i32_0 = arith.constant 0 : i32
    return %arg0, %c0_i32 : i32, i32
  }
  func.func @transform_1(%arg0: i32) -> (i32, i32) {
    %c0_i32 = arith.constant 0 : i32
    %c0_i32_0 = arith.constant 0 : i32
    %c0_i32_1 = arith.constant 0 : i32
    return %c0_i32, %c0_i32_0 : i32, i32
  }
  func.func @transform_2(%arg0: i32) -> (i32, i32) {
    %c0_i32 = arith.constant 0 : i32
    %c0_i32_0 = arith.constant 0 : i32
    %c0_i32_1 = arith.constant 0 : i32
    return %c0_i32, %c0_i32_0 : i32, i32
  }
  func.func @transform_3(%arg0: i32) -> (i32, i32) {
    %c0_i32 = arith.constant 0 : i32
    %c0_i32_0 = arith.constant 0 : i32
    %c0_i32_1 = arith.constant 0 : i32
    return %c0_i32, %c0_i32_0 : i32, i32
  }
  func.func @transform_4(%arg0: i32) -> (i32, i32) {
    %c0_i32 = arith.constant 0 : i32
    %c0_i32_0 = arith.constant 0 : i32
    %c0_i32_1 = arith.constant 0 : i32
    return %c0_i32, %c0_i32_0 : i32, i32
  }
  func.func @transform_5(%arg0: i32) -> (i32, i32) {
    %c0_i32 = arith.constant 0 : i32
    %c0_i32_0 = arith.constant 0 : i32
    return %arg0, %c0_i32 : i32, i32
  }
  func.func @transform_6(%arg0: i32) -> (i32, i32) {
    %c0_i32 = arith.constant 0 : i32
    %c0_i32_0 = arith.constant 0 : i32
    return %arg0, %c0_i32 : i32, i32
  }
}

</mosaic_0001>

<llo_original>
// kernel: sparse_autoencoder.1
$region0: #{sparse_autoencoder.1}
  #allocation0 [shape = 'u32[]', space=smem, size = 0x4, offset = 0x4, fixed_abs, tag = 'smem constant byte address 0x4 - core index']
  #allocation1 [shape = 'u32[72,128]{1,0:T(1,128)}', space=vmem, size = 0x9000, scoped, tag = 'internal scratch']
  %s0 = inlined_call_operand.vmem [shape: f32[8,128], index: 0, kind: input, shape index: {}]
  %s1 = inlined_call_operand.vmem [shape: f32[128,128], index: 1, kind: input, shape index: {}]
  %s2 = inlined_call_operand.vmem [shape: f32[1,128], index: 2, kind: input, shape index: {}]
  %s3 = inlined_call_operand.vmem [shape: f32[128,128], index: 3, kind: input, shape index: {}]
  %s4 = inlined_call_operand.vmem [shape: f32[1,128], index: 4, kind: input, shape index: {}]
  %s5 = inlined_call_operand.hbm [shape: f32[8,128], index: 5, kind: output, shape index: {0}]
  %s6 = inlined_call_operand.hbm [shape: f32[8,128], index: 6, kind: output, shape index: {1}]
  %7 = xla_tuple %s5, %s6
  %s8 = sld [smem:[#allocation0]]
  $region38: #{sparse_autoencoder.1} parent=0
    _
  %s10 = ssub.s32 1, %s8
  %s11 = scalar_select 0, %s10, %s8
  $region1: #{sparse_autoencoder.1} parent=0
    #allocation2 [shape = 'u8[4096]{0}', space=vmem, size = 0x1000, scoped, tag = 'output window, operand 0, single buffered']
    #allocation3 [shape = 's32[1]{0}', space=sflag, size = 0x4, scoped, tag = 'scoped memory for sparse_autoencoder.1']
    #allocation4 [shape = 'u8[4096]{0}', space=vmem, size = 0x1000, scoped, tag = 'output window, operand 1, single buffered']
    #allocation5 [shape = 's32[1]{0}', space=sflag, size = 0x4, scoped, tag = 'scoped memory for sparse_autoencoder.1']
    %12 = vsyncpa [#allocation3], 0
    %13 = vsyncpa [#allocation5], 0
    // Predicated region
    $region2: #{sparse_autoencoder.1} parent=1 // pred_check
      _
    $region3: #{sparse_autoencoder.1} parent=1 // pred_check_branch
      %15 = sbr.rel (0) target = $region5
    $region4: #{sparse_autoencoder.1} parent=1 // pred_region
      _
    $region5: #{sparse_autoencoder.1} parent=1 // pred_fallthru
      _
    // Predicated region
    $region6: #{sparse_autoencoder.1} parent=1 // pred_check
      _
    $region7: #{sparse_autoencoder.1} parent=1 // pred_check_branch
      %17 = sbr.rel (0) target = $region9
    $region8: #{sparse_autoencoder.1} parent=1 // pred_region
      _
    $region9: #{sparse_autoencoder.1} parent=1 // pred_fallthru
      _
    // Predicated region
    $region10: #{sparse_autoencoder.1} parent=1 // pred_check
      _
    $region11: #{sparse_autoencoder.1} parent=1 // pred_check_branch
      %19 = sbr.rel (0) target = $region13
    $region12: #{sparse_autoencoder.1} parent=1 // pred_region
      _
    $region13: #{sparse_autoencoder.1} parent=1 // pred_fallthru
      _
    // Predicated region
    $region14: #{sparse_autoencoder.1} parent=1 // pred_check
      _
    $region15: #{sparse_autoencoder.1} parent=1 // pred_check_branch
      %21 = sbr.rel (0) target = $region17
    $region16: #{sparse_autoencoder.1} parent=1 // pred_region
      _
    $region17: #{sparse_autoencoder.1} parent=1 // pred_fallthru
      _
    // Predicated region
    $region18: #{sparse_autoencoder.1} parent=1 // pred_check
      _
    $region19: #{sparse_autoencoder.1} parent=1 // pred_check_branch
      %23 = sbr.rel (0) target = $region21
    $region20: #{sparse_autoencoder.1} parent=1 // pred_region
      _
    $region21: #{sparse_autoencoder.1} parent=1 // pred_fallthru
      _
    %v24 = vld [vmem:[%s0] sm:$0xff]
    %v25 = vld [vmem:[%s1] sm:$0xff]
    %v26 = vld [vmem:[%s1 + $0x8] sm:$0xff]
    %v27 = vld [vmem:[%s1 + $0x10] sm:$0xff]
    %v28 = vld [vmem:[%s1 + $0x18] sm:$0xff]
    %v29 = vld [vmem:[%s1 + $0x20] sm:$0xff]
    %v30 = vld [vmem:[%s1 + $0x28] sm:$0xff]
    %v31 = vld [vmem:[%s1 + $0x30] sm:$0xff]
    %v32 = vld [vmem:[%s1 + $0x38] sm:$0xff]
    %v33 = vld [vmem:[%s1 + $0x40] sm:$0xff]
    %v34 = vld [vmem:[%s1 + $0x48] sm:$0xff]
    %v35 = vld [vmem:[%s1 + $0x50] sm:$0xff]
    %v36 = vld [vmem:[%s1 + $0x58] sm:$0xff]
    %v37 = vld [vmem:[%s1 + $0x60] sm:$0xff]
    %v38 = vld [vmem:[%s1 + $0x68] sm:$0xff]
    %v39 = vld [vmem:[%s1 + $0x70] sm:$0xff]
    %v40 = vld [vmem:[%s1 + $0x78] sm:$0xff]
    %v41 = vld [vmem:[%s2] sm:$0x1]
    %v43 = vperm.slane %v41, 0
    %45 = vmatpush.msra.mxu0 %v40
    %46 = vmatpush.msra.mxu0 %v39
    %47 = vmatpush.msra.mxu0 %v38
    %48 = vmatpush.msra.mxu0 %v37
    %49 = vmatpush.msra.mxu0 %v36
    %50 = vmatpush.msra.mxu0 %v35
    %51 = vmatpush.msra.mxu0 %v34
    %52 = vmatpush.msra.mxu0 %v33
    %53 = vmatpush.msra.mxu0 %v32
    %54 = vmatpush.msra.mxu0 %v31
    %55 = vmatpush.msra.mxu0 %v30
    %56 = vmatpush.msra.mxu0 %v29
    %57 = vmatpush.msra.mxu0 %v28
    %58 = vmatpush.msra.mxu0 %v27
    %59 = vmatpush.msra.mxu0 %v26
    %60 = vmatpush.msra.mxu0 %v25
    %61 = vmatmul.f32.gmra.mxu0 %v24
    %v62 = vpop.f32.mrf.mxu0
    %v63 = vadd.f32 %v43, %v62
    %64 = vdwg.mxu0
    %v65 = vmax.f32 %v63, 0.0
    %66 = vst [vmem:[#allocation2] sm:$0xff] %v65
    %v67 = vld [vmem:[%s3] sm:$0xff]
    %v68 = vld [vmem:[%s3 + $0x8] sm:$0xff]
    %v69 = vld [vmem:[%s3 + $0x10] sm:$0xff]
    %v70 = vld [vmem:[%s3 + $0x18] sm:$0xff]
    %v71 = vld [vmem:[%s3 + $0x20] sm:$0xff]
    %v72 = vld [vmem:[%s3 + $0x28] sm:$0xff]
    %v73 = vld [vmem:[%s3 + $0x30] sm:$0xff]
    %v74 = vld [vmem:[%s3 + $0x38] sm:$0xff]
    %v75 = vld [vmem:[%s3 + $0x40] sm:$0xff]
    %v76 = vld [vmem:[%s3 + $0x48] sm:$0xff]
    %v77 = vld [vmem:[%s3 + $0x50] sm:$0xff]
    %v78 = vld [vmem:[%s3 + $0x58] sm:$0xff]
    %v79 = vld [vmem:[%s3 + $0x60] sm:$0xff]
    %v80 = vld [vmem:[%s3 + $0x68] sm:$0xff]
    %v81 = vld [vmem:[%s3 + $0x70] sm:$0xff]
    %v82 = vld [vmem:[%s3 + $0x78] sm:$0xff]
    %v83 = vld [vmem:[%s4] sm:$0x1]
    %v85 = vperm.slane %v83, 0
    %87 = vmatpush.msra.mxu0 %v82
    %88 = vmatpush.msra.mxu0 %v81
    %89 = vmatpush.msra.mxu0 %v80
    %90 = vmatpush.msra.mxu0 %v79
    %91 = vmatpush.msra.mxu0 %v78
    %92 = vmatpush.msra.mxu0 %v77
    %93 = vmatpush.msra.mxu0 %v76
    %94 = vmatpush.msra.mxu0 %v75
    %95 = vmatpush.msra.mxu0 %v74
    %96 = vmatpush.msra.mxu0 %v73
    %97 = vmatpush.msra.mxu0 %v72
    %98 = vmatpush.msra.mxu0 %v71
    %99 = vmatpush.msra.mxu0 %v70
    %100 = vmatpush.msra.mxu0 %v69
    %101 = vmatpush.msra.mxu0 %v68
    %102 = vmatpush.msra.mxu0 %v67
    %103 = vmatmul.f32.gmra.mxu0 %v65
    %v104 = vpop.f32.mrf.mxu0
    %v105 = vadd.f32 %v85, %v104
    %106 = vdwg.mxu0
    %v107 = vxor.u32 %v105, 2147483648
    %v108 = vmul.f32 %v107, 1.442695
    %v109 = vpow.pop %v108
    %v110 = vadd.f32 %v109, 1.0
    %v111 = vrcp.pop %v110
    %v112 = vmul.f32 %v110, %v111
    %v113 = vsub.f32 1.0, %v112
    %v114 = vmul.f32 %v111, %v113
    %v115 = vadd.f32 %v111, %v114
    %vm116 = vweird.f32 %v110
    %vm117 = vweird.f32 %v111
    %vm118 = vmor %vm116, %vm117
    %v119 = vsel %vm118, %v111, %v115
    %v120 = vand.u32 2147483647, %v110
    %vm121 = vcmp.eq.f32.partialorder %v120, 8.507059e+37
    %v122 = vand.u32 %v110, 2147483648
    %v123 = vor.u32 1.1754944e-38, %v122
    %v124 = vsel %vm121, %v123, %v119
    %v125 = vmul.f32 1.0, %v124
    %126 = vst [vmem:[#allocation4] sm:$0xff] %v125
    // Predicated region
    $region22: #{sparse_autoencoder.1} parent=1 // pred_check
      _
    $region23: #{sparse_autoencoder.1} parent=1 // pred_check_branch
      %128 = sbr.rel (0) target = $region25
    $region24: #{sparse_autoencoder.1} parent=1 // pred_region
      %130 = vsyncadd [#allocation3], 0
      %s132 = sshll.u32 [#allocation2], 4
      %s133 = int_to_ptr.vmem [resolvable:$true] %s132
      %s134 = sshll.u32 %s5, 4
      %s135 = int_to_ptr.hbm [resolvable:$true] %s134
      %137 = dma.vmem_to_hbm [thread:$0]  %s133, 128, %s135, [#allocation3]
    $region25: #{sparse_autoencoder.1} parent=1 // pred_fallthru
      _
    // Predicated region
    $region26: #{sparse_autoencoder.1} parent=1 // pred_check
      _
    $region27: #{sparse_autoencoder.1} parent=1 // pred_check_branch
      %139 = sbr.rel (0) target = $region29
    $region28: #{sparse_autoencoder.1} parent=1 // pred_region
      %141 = vsyncadd [#allocation5], 0
      %s143 = sshll.u32 [#allocation4], 4
      %s144 = int_to_ptr.vmem [resolvable:$true] %s143
      %s145 = sshll.u32 %s6, 4
      %s146 = int_to_ptr.hbm [resolvable:$true] %s145
      %148 = dma.vmem_to_hbm [thread:$0]  %s144, 128, %s146, [#allocation5]
    $region29: #{sparse_autoencoder.1} parent=1 // pred_fallthru
      _
    // Predicated region
    $region30: #{sparse_autoencoder.1} parent=1 // pred_check
      _
    $region31: #{sparse_autoencoder.1} parent=1 // pred_check_branch
      %150 = sbr.rel (0) target = $region33
    $region32: #{sparse_autoencoder.1} parent=1 // pred_region
      %152 = dma.done [#allocation3], 128
    $region33: #{sparse_autoencoder.1} parent=1 // pred_fallthru
      _
    // Predicated region
    $region34: #{sparse_autoencoder.1} parent=1 // pred_check
      _
    $region35: #{sparse_autoencoder.1} parent=1 // pred_check_branch
      %154 = sbr.rel (0) target = $region37
    $region36: #{sparse_autoencoder.1} parent=1 // pred_region
      %156 = dma.done [#allocation5], 128
    $region37: #{sparse_autoencoder.1} parent=1 // pred_fallthru
      _
    %157 = vsyncpa [#allocation3], 1
    %158 = vsyncpa [#allocation5], 1

</llo_original>
